<compile_context>
chip_gen: v7x
topology: tpu7x:2x2x1
jax: 0.10.0
libtpu: 0.0.40
codegen_flags: <defaults>
</compile_context>

<pallas_src>
import functools
import math

import jax
import jax.numpy as jnp
from jax.experimental import pallas as pl
from jax.experimental.pallas import tpu as pltpu


# ----------------------------------------------------------------------------
# small helpers
# ----------------------------------------------------------------------------
def _ceil_to(x, m):
    return (x + m - 1) // m * m


def _vmem_limit(est_bytes):
    # Size the scoped-VMEM request from the tile footprint (2x slack), clamp to [8, 32] MiB so it
    # stays well under v7x's 64 MiB physical VMEM while still permitting large tiles on v5e/v6e.
    return int(min(max(2 * est_bytes + (2 << 20), 8 << 20), 32 << 20))


def _pick_mn_tiles(M, N):
    """Tile sizes for a single-K-step fused matmul.  N is pre-padded to a multiple of 128."""
    Mp = _ceil_to(M, 8)
    tm = Mp if Mp <= 512 else 256
    tn = 256 if (N >= 256 and N % 256 == 0) else 128
    # Megacore: ensure >= 2 blocks on a parallel axis (costs ~one extra grid step on 1-TC parts).
    if (-(-Mp // tm)) * (N // tn) < 2:
        if tm % 16 == 0:
            tm //= 2
        elif tn > 128:
            tn //= 2
    Mp = _ceil_to(M, tm)
    return tm, tn, Mp


# ----------------------------------------------------------------------------
# fused matmul (single K step): out = A @ W + bias [+ residual] [relu]
# ----------------------------------------------------------------------------
def _make_fused_kernel(apply_relu: bool, has_residual: bool):
    """No-scratch fast path: bf16 MXU dot, f32 epilogue, direct store (K never tiled here)."""

    def kernel(*refs):
        if has_residual:
            a_ref, w_ref, b_ref, r_ref, o_ref = refs
        else:
            a_ref, w_ref, b_ref, o_ref = refs
        out = jnp.dot(a_ref[...], w_ref[...], preferred_element_type=jnp.float32)
        out = out + b_ref[...]
        if has_residual:
            out = out + r_ref[...].astype(jnp.float32)
        if apply_relu:
            out = jnp.maximum(out, 0.0)
        o_ref[...] = out.astype(o_ref.dtype)

    return kernel


def _fused_matmul_pallas(a, w, bias, residual, relu, out_dtype):
    """a:(M,K) bf16, w:(K,Np) bf16 (N pre-padded to 128), bias:(1,Np) f32, residual:(M,n)|None."""
    M, K = a.shape
    Kw, N = w.shape
    assert K == Kw, (K, Kw)
    if K > 4096:  # never hit for this backbone (max K = 9*128 = 1152)
        raise ValueError("K-tiled matmul path not needed for this backbone.")
    if a.dtype != jnp.bfloat16:
        a = a.astype(jnp.bfloat16)
    tm, tn, Mp = _pick_mn_tiles(M, N)
    if Mp != M:
        a = jnp.pad(a, ((0, Mp - M), (0, 0)))

    args = [a, w, bias]
    in_specs = [
        pl.BlockSpec((tm, K), lambda i, j: (i, 0)),
        pl.BlockSpec((K, tn), lambda i, j: (0, j)),
        pl.BlockSpec((1, tn), lambda i, j: (0, j)),
    ]
    has_res = residual is not None
    if has_res:
        r = residual
        if r.shape != (Mp, N):
            r = jnp.pad(r, ((0, Mp - r.shape[0]), (0, N - r.shape[1])))
        in_specs.append(pl.BlockSpec((tm, tn), lambda i, j: (i, j)))
        args.append(r)

    out_bytes = jnp.dtype(out_dtype).itemsize
    est = (2 * (tm * K + K * tn) * 2 + 2 * tm * tn * out_bytes
           + (2 * tm * tn * 2 if has_res else 0) + tm * tn * 4)
    out = pl.pallas_call(
        _make_fused_kernel(relu, has_res),
        out_shape=jax.ShapeDtypeStruct((Mp, N), out_dtype),
        grid_spec=pltpu.PrefetchScalarGridSpec(
            num_scalar_prefetch=0,
            grid=(Mp // tm, N // tn),
            in_specs=in_specs,
            out_specs=pl.BlockSpec((tm, tn), lambda i, j: (i, j)),
        ),
        compiler_params=pltpu.CompilerParams(
            dimension_semantics=("parallel", "parallel"),
            vmem_limit_bytes=_vmem_limit(est)),
    )(*args)
    return out[:M]


# ----------------------------------------------------------------------------
# direct 3x3 / stride-1 conv (+folded BN bias, relu) -- no im2col buffer in HBM
# ----------------------------------------------------------------------------
def _make_direct_conv_kernel(th: int, d: int, wo: int, relu: bool):
    """Reads row-block r and the first 2*d rows of row-block r+1 (halo) of the zero-padded NHWC
    activation, stages th+2d rows in VMEM scratch, and accumulates the 9 kernel taps on the MXU."""

    def kernel(xa_ref, xb_ref, w_ref, b_ref, o_ref, xbuf):
        cin = w_ref.shape[1]
        cout = w_ref.shape[2]
        xbuf[0:th] = xa_ref[0]
        xbuf[th:th + 2 * d] = xb_ref[0, 0:2 * d]
        acc = jnp.zeros((th * wo, cout), jnp.float32)
        for dy in range(3):
            for dx in range(3):
                a = xbuf[dy * d:dy * d + th, dx * d:dx * d + wo, :]
                a = a.reshape(th * wo, cin)
                acc = acc + jnp.dot(a, w_ref[dy * 3 + dx],
                                    preferred_element_type=jnp.float32)
        out = acc + b_ref[...]
        if relu:
            out = jnp.maximum(out, 0.0)
        o_ref[...] = out.reshape(1, th, wo, cout).astype(o_ref.dtype)

    return kernel


def _pick_row_tile(Ho, Wo_p, Cout_p, d):
    # rows per tile: keep the f32 accumulator (th*Wo_p, Cout_p) under ~1 MiB, th multiple of 8.
    cap = max(8, ((1 << 18) // max(1, Wo_p * Cout_p)) // 8 * 8)
    th = min(_ceil_to(Ho, 8), cap, 128)
    return max(th, 8, _ceil_to(2 * d, 8))


@functools.partial(jax.jit, static_argnames=("d", "relu", "n"))
def _direct_conv3x3_jit(x, w, bias, *, d, relu, n):
    """x:(B,H,W,Cin) bf16; w:(9,Cin,Np) bf16 (BN folded, Cout pre-padded); bias:(1,Np) f32."""
    B, H, W, Cin = x.shape
    Np = w.shape[-1]
    wo = _ceil_to(W, 8)                       # lane-friendly output width
    th = _pick_row_tile(H, wo, Np, d)
    Ho_pad = _ceil_to(H, th)
    n_rt = Ho_pad // th
    Hp = Ho_pad + th                          # one extra row block for the halo view
    Wp = wo + 2 * d
    xp = jnp.pad(x, ((0, 0), (d, Hp - d - H), (d, Wp - d - W), (0, 0)))

    est = (4 * th * Wp * Cin * 2 + 2 * 9 * Cin * Np * 2 + 2 * th * wo * Np * 2
           + (th + 2 * d) * Wp * Cin * 2 + th * wo * Np * 4)
    out = pl.pallas_call(
        _make_direct_conv_kernel(th, d, wo, relu),
        out_shape=jax.ShapeDtypeStruct((B, Ho_pad, wo, Np), jnp.bfloat16),
        grid_spec=pltpu.PrefetchScalarGridSpec(
            num_scalar_prefetch=0,
            grid=(B, n_rt),
            in_specs=[
                pl.BlockSpec((1, th, Wp, Cin), lambda b, r: (b, r, 0, 0)),
                pl.BlockSpec((1, th, Wp, Cin), lambda b, r: (b, r + 1, 0, 0)),
                pl.BlockSpec((9, Cin, Np), lambda b, r: (0, 0, 0)),
                pl.BlockSpec((1, Np), lambda b, r: (0, 0)),
            ],
            out_specs=pl.BlockSpec((1, th, wo, Np), lambda b, r: (b, r, 0, 0)),
            scratch_shapes=[pltpu.VMEM((th + 2 * d, Wp, Cin), jnp.bfloat16)],
        ),
        compiler_params=pltpu.CompilerParams(
            dimension_semantics=("parallel", "parallel"),
            vmem_limit_bytes=_vmem_limit(est)),
    )(xp, xp, w, bias)
    return out[:, :H, :W, :n]


# ----------------------------------------------------------------------------
# im2col path (1x1 convs = pure reshape; only the two strided 3x3 convs expand)
# ----------------------------------------------------------------------------
def _im2col(x, kh, kw, stride, padding, dilation):
    """x:(B,H,W,C) -> ((B*Ho*Wo, kh*kw*C), Ho, Wo).  Patch order (dy, dx, C)."""
    B, H, W, C = x.shape
    if padding:
        x = jnp.pad(x, ((0, 0), (padding, padding), (padding, padding), (0, 0)))
    Hp, Wp = H + 2 * padding, W + 2 * padding
    Ho = (Hp - dilation * (kh - 1) - 1) // stride + 1
    Wo = (Wp - dilation * (kw - 1) - 1) // stride + 1
    cols = []
    for dy in range(kh):
        for dx in range(kw):
            y0, x0 = dy * dilation, dx * dilation
            patch = jax.lax.slice(
                x, (0, y0, x0, 0),
                (B, y0 + (Ho - 1) * stride + 1, x0 + (Wo - 1) * stride + 1, C),
                (1, stride, stride, 1))
            cols.append(patch)
    a = cols[0] if len(cols) == 1 else jnp.concatenate(cols, axis=-1)
    return a.reshape(B * Ho * Wo, kh * kw * C), Ho, Wo


@functools.partial(jax.jit, static_argnames=("n", "kh", "kw", "stride", "padding",
                                             "dilation", "relu"))
def _conv_bn_jit(x, w, bias, residual, *, n, kh, kw, stride, padding, dilation, relu):
    B = x.shape[0]
    cols, Ho, Wo = _im2col(x, kh, kw, stride, padding, dilation)
    res2d = None if residual is None else residual.reshape(B * Ho * Wo,
                                                           residual.shape[-1])
    out = _fused_matmul_pallas(cols, w, bias, res2d, relu, jnp.bfloat16)
    return out[:, :n].reshape(B, Ho, Wo, n)


def conv_bn(x, p, stride=1, padding=0, dilation=1, relu=True, residual=None):
    if p["direct"] and stride == 1:
        assert padding == dilation and residual is None
        return _direct_conv3x3_jit(x, p["w"], p["bias"], d=dilation, relu=relu, n=p["n"])
    return _conv_bn_jit(x, p["w"], p["bias"], residual, n=p["n"],
                        kh=p["kh"], kw=p["kw"], stride=stride,
                        padding=padding, dilation=dilation, relu=relu)


# ----------------------------------------------------------------------------
# 3x3 / stride-2 / pad-1 max pool (nn.MaxPool2d(3, 2, 1))
# ----------------------------------------------------------------------------
@jax.jit
def maxpool2d_3x3s2p1(x):
    # Fused XLA 9-way max over shifted strided views (review: no (9, M, C) HBM stack; a Pallas
    # kernel adds nothing for this memory-bound elementwise reduce).
    B, H, W, C = x.shape
    xp = jnp.pad(x, ((0, 0), (1, 1), (1, 1), (0, 0)),
                 constant_values=float("-inf"))
    Ho = (H + 2 - 3) // 2 + 1
    Wo = (W + 2 - 3) // 2 + 1
    out = None
    for dy in range(3):
        for dx in range(3):
            v = jax.lax.slice(xp, (0, dy, dx, 0),
                              (B, dy + (Ho - 1) * 2 + 1, dx + (Wo - 1) * 2 + 1, C),
                              (1, 2, 2, 1))
            out = v if out is None else jnp.maximum(out, v)
    return out


# ----------------------------------------------------------------------------
# bottleneck head: 1x1 conv over cat([layer3, layer2], C) fused into ONE pallas_call
# ----------------------------------------------------------------------------
def _bottleneck_kernel(a3_ref, a2_ref, w3_ref, w2_ref, b_ref, o_ref):
    acc = jnp.dot(a3_ref[...], w3_ref[...], preferred_element_type=jnp.float32)
    acc = acc + jnp.dot(a2_ref[...], w2_ref[...], preferred_element_type=jnp.float32)
    o_ref[...] = (acc + b_ref[...]).astype(o_ref.dtype)


@functools.partial(jax.jit, static_argnames=("n",))
def _bottleneck_head(feat3, feat2, w3, w2, bias, *, n):
    B, H, W_, C3 = feat3.shape
    C2 = feat2.shape[-1]
    N = w3.shape[1]
    M = B * H * W_
    a3 = feat3.reshape(M, C3)
    a2 = feat2.reshape(M, C2)
    tm, tn, Mp = _pick_mn_tiles(M, N)
    if Mp != M:
        a3 = jnp.pad(a3, ((0, Mp - M), (0, 0)))
        a2 = jnp.pad(a2, ((0, Mp - M), (0, 0)))
    est = 2 * ((tm * (C3 + C2) + (C3 + C2) * tn) * 2 + tm * tn * 4)
    out = pl.pallas_call(
        _bottleneck_kernel,
        out_shape=jax.ShapeDtypeStruct((Mp, N), jnp.float32),
        grid_spec=pltpu.PrefetchScalarGridSpec(
            num_scalar_prefetch=0,
            grid=(Mp // tm, N // tn),
            in_specs=[
                pl.BlockSpec((tm, C3), lambda i, j: (i, 0)),
                pl.BlockSpec((tm, C2), lambda i, j: (i, 0)),
                pl.BlockSpec((C3, tn), lambda i, j: (0, j)),
                pl.BlockSpec((C2, tn), lambda i, j: (0, j)),
                pl.BlockSpec((1, tn), lambda i, j: (0, j)),
            ],
            out_specs=pl.BlockSpec((tm, tn), lambda i, j: (i, j)),
        ),
        compiler_params=pltpu.CompilerParams(
            dimension_semantics=("parallel", "parallel"),
            vmem_limit_bytes=_vmem_limit(est)),
    )(a3, a2, w3, w2, bias)
    return out[:M, :n].reshape(B, H, W_, n)


# ----------------------------------------------------------------------------
# deterministic parameter construction (inference BN folded; weights pre-padded + bf16)
# ----------------------------------------------------------------------------
def _init_conv_bn(key, kh, kw, cin, cout, direct=False):
    k1, k2, k3, k4 = jax.random.split(key, 4)
    fan_in = kh * kw * cin
    w = jax.random.normal(k1, (kh, kw, cin, cout), jnp.float32) * math.sqrt(2.0 / fan_in)
    gamma = 1.0 + 0.1 * jax.random.normal(k2, (cout,), jnp.float32)
    beta = 0.1 * jax.random.normal(k3, (cout,), jnp.float32)
    mean = 0.05 * jax.random.normal(k4, (cout,), jnp.float32)
    var = jnp.ones((cout,), jnp.float32)
    scale = gamma / jnp.sqrt(var + 1e-5)
    bias = beta - mean * scale
    w = w * scale                                   # fold BN scale (bf16 weight -> small numerics delta)
    np_ = _ceil_to(cout, 128)
    b_p = jnp.pad(bias, (0, np_ - cout)).reshape(1, np_)
    if direct:
        w_p = jnp.pad(w.reshape(kh * kw, cin, cout).astype(jnp.bfloat16),
                      ((0, 0), (0, 0), (0, np_ - cout)))
    else:
        w_p = jnp.pad(w.reshape(kh * kw * cin, cout).astype(jnp.bfloat16),
                      ((0, 0), (0, np_ - cout)))
    return dict(w=w_p, bias=b_p, kh=kh, kw=kw, n=cout, direct=direct)


def make_feature_extractor_params(key, hidden_dim=256):
    keys = iter(jax.random.split(key, 128))
    params = {}
    # v2 deep stem: conv(3->64,s2) conv(64->64) conv(64->128), each + BN + ReLU, then maxpool
    params["stem"] = [
        _init_conv_bn(next(keys), 3, 3, 3, 64, direct=False),     # stride 2 -> im2col path
        _init_conv_bn(next(keys), 3, 3, 64, 64, direct=True),
        _init_conv_bn(next(keys), 3, 3, 64, 128, direct=True),
    ]

    def make_layer(inplanes, planes, blocks, stride, dilation):
        layer = []
        for b in range(blocks):
            blk_stride = stride if b == 0 else 1
            needs_ds = (b == 0) and (stride != 1 or inplanes != planes * 4)
            blk = dict(
                conv1=_init_conv_bn(next(keys), 1, 1, inplanes, planes),
                conv2=_init_conv_bn(next(keys), 3, 3, planes, planes,
                                    direct=(blk_stride == 1)),
                conv3=_init_conv_bn(next(keys), 1, 1, planes, planes * 4),
                downsample=_init_conv_bn(next(keys), 1, 1, inplanes, planes * 4)
                if needs_ds else None,
                stride=blk_stride, dilation=dilation)
            layer.append(blk)
            inplanes = planes * 4
        return layer, inplanes

    inpl = 128
    params["layer1"], inpl = make_layer(inpl, 64, 3, stride=1, dilation=1)
    params["layer2"], inpl = make_layer(inpl, 128, 4, stride=2, dilation=1)
    # v2 modification: layer3 conv2/downsample stride -> 1, conv2 dilation/padding -> 2
    params["layer3"], inpl = make_layer(inpl, 256, 6, stride=1, dilation=2)

    kb1, kb2 = jax.random.split(next(keys))
    cin_b = 1024 + 512
    np_ = _ceil_to(hidden_dim, 128)
    wb = jax.random.normal(kb1, (cin_b, hidden_dim), jnp.float32) * math.sqrt(1.0 / cin_b)
    wb = jnp.pad(wb.astype(jnp.bfloat16), ((0, 0), (0, np_ - hidden_dim)))
    bb = jnp.pad(0.01 * jax.random.normal(kb2, (hidden_dim,), jnp.float32),
                 (0, np_ - hidden_dim)).reshape(1, np_)
    params["bottleneck"] = dict(w3=wb[:1024], w2=wb[1024:], bias=bb, n=hidden_dim)
    return params


# ----------------------------------------------------------------------------
# forward pass (matches Feature_Extractor.forward semantics, version='v2')
# ----------------------------------------------------------------------------
def _bottleneck_block(x, blk):
    stride, dil = blk["stride"], blk["dilation"]
    if blk["downsample"] is not None:
        shortcut = conv_bn(x, blk["downsample"], stride=stride, relu=False)
    else:
        shortcut = x
    h = conv_bn(x, blk["conv1"], relu=True)
    h = conv_bn(h, blk["conv2"], stride=stride, padding=dil, dilation=dil, relu=True)
    return conv_bn(h, blk["conv3"], relu=True, residual=shortcut)


def _run_layer(x, layer):
    for blk in layer:
        x = _bottleneck_block(x, blk)
    return x


def feature_extractor_forward(x_nchw, params):
    # NCHW/f32 at the boundary (PyTorch convention), NHWC/bf16 for all kernel compute.
    x = jnp.transpose(x_nchw, (0, 2, 3, 1)).astype(jnp.bfloat16)
    h = x
    for p, s in zip(params["stem"], (2, 1, 1)):
        h = conv_bn(h, p, stride=s, padding=1, dilation=1, relu=True)
    feat0 = maxpool2d_3x3s2p1(h)                       # layer0
    feat1 = _run_layer(feat0, params["layer1"])        # layer1
    feat2 = _run_layer(feat1, params["layer2"])        # layer2
    feat3 = _run_layer(feat2, params["layer3"])        # layer3
    bt = params["bottleneck"]
    out_feat = _bottleneck_head(feat3, feat2, bt["w3"], bt["w2"], bt["bias"], n=bt["n"])

    to_nchw_f32 = lambda t: jnp.transpose(t, (0, 3, 1, 2)).astype(jnp.float32)
    feat_dicts = {
        "layer0_feat": to_nchw_f32(feat0),
        "layer1_feat": to_nchw_f32(feat1),
        "layer2_feat": to_nchw_f32(feat2),
        "layer3_feat": to_nchw_f32(feat3),
    }
    return to_nchw_f32(out_feat), feat_dicts


if __name__ == "__main__":
    key = jax.random.PRNGKey(0)
    kp, kx = jax.random.split(key)
    params = make_feature_extractor_params(kp, hidden_dim=256)
    x = jax.random.normal(kx, (2, 3, 32, 32), jnp.float32)  # small NCHW RGB input

    out_feat, feat_dicts = feature_extractor_forward(x, params)
    out_feat = jax.block_until_ready(out_feat)
    for v in feat_dicts.values():
        jax.block_until_ready(v)

    assert out_feat.shape == (2, 256, 4, 4), out_feat.shape
    assert feat_dicts["layer0_feat"].shape == (2, 128, 8, 8)
    assert feat_dicts["layer1_feat"].shape == (2, 256, 8, 8)
    assert feat_dicts["layer2_feat"].shape == (2, 512, 4, 4)
    assert feat_dicts["layer3_feat"].shape == (2, 1024, 4, 4)
    assert bool(jnp.all(jnp.isfinite(out_feat)))
    print("KERNEL_OK")
</pallas_src>

<mosaic_0001>
module attributes {stable_mosaic.version = 11 : i64} {
  func.func @kernel(%arg0: i32, %arg1: i32, %arg2: memref<256x27xbf16, #tpu.memory_space<vmem>>, %arg3: memref<27x128xbf16, #tpu.memory_space<vmem>>, %arg4: memref<1x128xf32, #tpu.memory_space<vmem>>, %arg5: memref<256x128xbf16, #tpu.memory_space<vmem>>) attributes {dimension_semantics = [#tpu.dimension_semantics<parallel>, #tpu.dimension_semantics<parallel>], iteration_bounds = array<i64: 2, 1>, scalar_prefetch = 0 : i64, scratch_operands = 0 : i64, tpu.core_type = #tpu.core_type<tc>, window_params = [{transform_indices = @transform_0, window_bounds = array<i64: 256, 27>}, {transform_indices = @transform_1, window_bounds = array<i64: 27, 128>}, {transform_indices = @transform_2, window_bounds = array<i64: 1, 128>}, {transform_indices = @transform_3, window_bounds = array<i64: 256, 128>}]} {
    %c0 = arith.constant 0 : index
    %c0_0 = arith.constant 0 : index
    %0 = vector.load %arg2[%c0, %c0_0] : memref<256x27xbf16, #tpu.memory_space<vmem>>, vector<256x27xbf16>
    %c0_1 = arith.constant 0 : index
    %c0_2 = arith.constant 0 : index
    %1 = vector.load %arg3[%c0_1, %c0_2] : memref<27x128xbf16, #tpu.memory_space<vmem>>, vector<27x128xbf16>
    %cst = arith.constant dense<0.000000e+00> : vector<256x128xf32>
    %2 = tpu.matmul %0, %1, %cst {dimension_numbers = #tpu.dot_dimension_numbers<[1], [0], [0], [1], [0, 0, 1, 1], [], []>} : vector<256x27xbf16>, vector<27x128xbf16>, vector<256x128xf32> -> vector<256x128xf32>
    %c0_3 = arith.constant 0 : index
    %c0_4 = arith.constant 0 : index
    %3 = vector.load %arg4[%c0_3, %c0_4] : memref<1x128xf32, #tpu.memory_space<vmem>>, vector<1x128xf32>
    %4 = vector.broadcast %3 : vector<1x128xf32> to vector<256x128xf32>
    %5 = arith.addf %2, %4 : vector<256x128xf32>
    %cst_5 = arith.constant 0.000000e+00 : f32
    %6 = vector.broadcast %cst_5 : f32 to vector<256x128xf32>
    %7 = arith.maximumf %5, %6 : vector<256x128xf32>
    %8 = arith.truncf %7 : vector<256x128xf32> to vector<256x128xbf16>
    %c0_6 = arith.constant 0 : index
    %c0_7 = arith.constant 0 : index
    %9 = vector.load %arg5[%c0_6, %c0_7] : memref<256x128xbf16, #tpu.memory_space<vmem>>, vector<256x128xbf16>
    tpu.vector_store %arg5[%c0_6, %c0_7], %8 {strides = array<i32>} : memref<256x128xbf16, #tpu.memory_space<vmem>>, vector<256x128xbf16>,
    return
  }
  func.func @transform_0(%arg0: i32, %arg1: i32) -> (i32, i32) {
    %c0_i32 = arith.constant 0 : i32
    %c0_i32_0 = arith.constant 0 : i32
    return %arg0, %c0_i32 : i32, i32
  }
  func.func @transform_1(%arg0: i32, %arg1: i32) -> (i32, i32) {
    %c0_i32 = arith.constant 0 : i32
    %c0_i32_0 = arith.constant 0 : i32
    return %c0_i32, %arg1 : i32, i32
  }
  func.func @transform_2(%arg0: i32, %arg1: i32) -> (i32, i32) {
    %c0_i32 = arith.constant 0 : i32
    %c0_i32_0 = arith.constant 0 : i32
    return %c0_i32, %arg1 : i32, i32
  }
  func.func @transform_3(%arg0: i32, %arg1: i32) -> (i32, i32) {
    %c0_i32 = arith.constant 0 : i32
    return %arg0, %arg1 : i32, i32
  }
}

</mosaic_0001>

<llo_original>
// kernel: _conv_bn_jit.1
$region0: #{_conv_bn_jit.1}
  #allocation0 [shape = 'u32[]', space=smem, size = 0x4, offset = 0x4, fixed_abs, tag = 'smem constant byte address 0x4 - core index']
  #allocation1 [shape = 'u32[144,128]{1,0:T(1,128)}', space=vmem, size = 0x12000, scoped, tag = 'internal scratch']
  %s0 = inlined_call_operand.vmem [shape: bf16[512,27], index: 0, kind: input, shape index: {}]
  %s1 = inlined_call_operand.vmem [shape: bf16[27,128], index: 1, kind: input, shape index: {}]
  %s2 = inlined_call_operand.vmem [shape: f32[1,128], index: 2, kind: input, shape index: {}]
  %s3 = inlined_call_operand.hbm [shape: bf16[512,128], index: 3, kind: output, shape index: {}]
  %s4 = sld [smem:[#allocation0]]
  $region45: #{_conv_bn_jit.1} parent=0
    _
  %s6 = ssub.s32 1, %s4
  %s7 = scalar_select 0, %s6, %s4
  $region1: #{_conv_bn_jit.1} parent=0
    #allocation2 [shape = 'u8[131072]{0}', space=vmem, size = 0x20000, scoped, tag = 'output window, operand 0']
    #allocation3 [shape = 's32[2]{0}', space=sflag, size = 0x8, scoped, tag = 'scoped memory for _conv_bn_jit.1']
    %8 = vsyncpa [#allocation3], 0
    %s9 = scalar_lea.sflag [#allocation3], 1
    %10 = vsyncpa %s9, 0
    loop: start=0, step=1, limit=4
    $region2: #{_conv_bn_jit.1} parent=1 // loop_pre_header
      _
    $region3: #{_conv_bn_jit.1} parent=1 // loop_header
      %s12 = sphi 0, %s16
      %p13 = scmp.ge.s32.totalorder %s12, 4
      %s19 = sphi 0, %s31
      %s20 = sphi 0, %s27
      %s21 = sphi 0, %s19
      %s22 = sphi 0, %s20
      %s23 = sphi 0, %s21
      %s24 = sphi 0, %s22
      %s34 = sphi 0, %s36
      %s37 = sphi 0, %s34
      %s38 = sphi 0, %s37
      %s54 = sphi 0, %s38
      %s60 = sphi 0, %s62
      %s63 = sphi 0, %s60
      %s64 = sphi 0, %s63
      %s80 = sphi 0, %s64
      %s86 = sphi 0, %s88
      %s89 = sphi 0, %s86
      %s90 = sphi 0, %s89
      %s106 = sphi 0, %s90
      %s114 = sphi 0, %s116
      %s117 = sphi 0, %s114
      %s118 = sphi 0, %s117
      %s134 = sphi 0, %s118
    $region4: #{_conv_bn_jit.1} parent=1 // loop_header_branch
      %15 = sbr.rel (%p13) target = $region8
    $region5: #{_conv_bn_jit.1} parent=1 // loop_body
      %s17 = ssub.s32 %s12, 1
      %s18 = ssub.s32 %s12, 2
      %s25 = sadd.s32 1, %s20
      %p26 = scmp.ge.s32.totalorder %s25, 1
      %s27 = scalar_select %p26, 0, %s25
      %s28 = sadd.s32 1, %s19
      %s29 = scalar_select %p26, %s28, %s19
      %p30 = scmp.ge.s32.totalorder %s29, 2
      %s31 = scalar_select %p30, 0, %s29
      %s32 = ssub.s32 %s19, %s31
      %p33 = scmp.eq.s32.totalorder %s32, 0
      %s35 = sadd.s32 %s34, 1
      %s36 = scalar_select %p33, %s34, %s35
      %p39 = pneg %p33
      %p40 = scmp.eq.s32.totalorder %s12, 1
      %p41 = por %p39, %p40
      %p42 = scmp.ne.s32.totalorder %s34, %s37
      %p43 = scmp.eq.s32.totalorder %s12, 0
      %p44 = por %p42, %p43
      %p45 = scmp.ne.s32.totalorder %s34, %s37
      %p46 = scmp.eq.s32.totalorder %s17, 1
      %p47 = por %p45, %p46
      %p48 = scmp.ne.s32.totalorder %s37, %s38
      %p49 = scmp.eq.s32.totalorder %s17, 0
      %p50 = por %p48, %p49
      %p51 = scmp.ne.s32.totalorder %s37, %s38
      %p52 = scmp.eq.s32.totalorder %s18, 1
      %p53 = por %p51, %p52
      %p55 = scmp.ne.s32.totalorder %s38, %s54
      %p56 = scmp.eq.s32.totalorder %s18, 0
      %p57 = por %p55, %p56
      %s58 = ssub.s32 %s20, %s27
      %p59 = scmp.eq.s32.totalorder %s58, 0
      %s61 = sadd.s32 %s60, 1
      %s62 = scalar_select %p59, %s60, %s61
      %p65 = pneg %p59
      %p66 = scmp.eq.s32.totalorder %s12, 1
      %p67 = por %p65, %p66
      %p68 = scmp.ne.s32.totalorder %s60, %s63
      %p69 = scmp.eq.s32.totalorder %s12, 0
      %p70 = por %p68, %p69
      %p71 = scmp.ne.s32.totalorder %s60, %s63
      %p72 = scmp.eq.s32.totalorder %s17, 1
      %p73 = por %p71, %p72
      %p74 = scmp.ne.s32.totalorder %s63, %s64
      %p75 = scmp.eq.s32.totalorder %s17, 0
      %p76 = por %p74, %p75
      %p77 = scmp.ne.s32.totalorder %s63, %s64
      %p78 = scmp.eq.s32.totalorder %s18, 1
      %p79 = por %p77, %p78
      %p81 = scmp.ne.s32.totalorder %s64, %s80
      %p82 = scmp.eq.s32.totalorder %s18, 0
      %p83 = por %p81, %p82
      %s84 = ssub.s32 %s20, %s27
      %p85 = scmp.eq.s32.totalorder %s84, 0
      %s87 = sadd.s32 %s86, 1
      %s88 = scalar_select %p85, %s86, %s87
      %p91 = pneg %p85
      %p92 = scmp.eq.s32.totalorder %s12, 1
      %p93 = por %p91, %p92
      %p94 = scmp.ne.s32.totalorder %s86, %s89
      %p95 = scmp.eq.s32.totalorder %s12, 0
      %p96 = por %p94, %p95
      %p97 = scmp.ne.s32.totalorder %s86, %s89
      %p98 = scmp.eq.s32.totalorder %s17, 1
      %p99 = por %p97, %p98
      %p100 = scmp.ne.s32.totalorder %s89, %s90
      %p101 = scmp.eq.s32.totalorder %s17, 0
      %p102 = por %p100, %p101
      %p103 = scmp.ne.s32.totalorder %s89, %s90
      %p104 = scmp.eq.s32.totalorder %s18, 1
      %p105 = por %p103, %p104
      %p107 = scmp.ne.s32.totalorder %s90, %s106
      %p108 = scmp.eq.s32.totalorder %s18, 0
      %p109 = por %p107, %p108
      %s110 = ssub.s32 %s19, %s31
      %s111 = ssub.s32 %s20, %s27
      %s112 = sor.u32 %s110, %s111
      %p113 = scmp.eq.s32.totalorder %s112, 0
      %s115 = sadd.s32 %s114, 1
      %s116 = scalar_select %p113, %s114, %s115
      %p119 = pneg %p113
      %p120 = scmp.eq.s32.totalorder %s12, 1
      %p121 = por %p119, %p120
      %p122 = scmp.ne.s32.totalorder %s114, %s117
      %p123 = scmp.eq.s32.totalorder %s12, 0
      %p124 = por %p122, %p123
      %p125 = scmp.ne.s32.totalorder %s114, %s117
      %p126 = scmp.eq.s32.totalorder %s17, 1
      %p127 = por %p125, %p126
      %p128 = scmp.ne.s32.totalorder %s117, %s118
      %p129 = scmp.eq.s32.totalorder %s17, 0
      %p130 = por %p128, %p129
      %p131 = scmp.ne.s32.totalorder %s117, %s118
      %p132 = scmp.eq.s32.totalorder %s18, 1
      %p133 = por %p131, %p132
      %p135 = scmp.ne.s32.totalorder %s118, %s134
      %p136 = scmp.eq.s32.totalorder %s18, 0
      %p137 = por %p135, %p136
      %p138 = scmp.le.s32.totalorder 1, %s12
      %p139 = scmp.lt.s32.totalorder %s12, 3
      %p140 = pnand %p138, %p139
      %p141 = pneg %p140
      // Predicated region
      $region9: #{_conv_bn_jit.1} parent=5 // pred_check
        _
      $region10: #{_conv_bn_jit.1} parent=5 // pred_check_branch
        %143 = sbr.rel (%p140) target = $region12
      $region11: #{_conv_bn_jit.1} parent=5 // pred_region
        %s144 = ssub.s32 %s12, 1
        // Predicated region
        $region13: #{_conv_bn_jit.1} parent=11 // pred_check
          %p145 = pneg %p76
        $region14: #{_conv_bn_jit.1} parent=11 // pred_check_branch
          %147 = sbr.rel (%p145) target = $region16
        $region15: #{_conv_bn_jit.1} parent=11 // pred_region
          %p148 = scmp.lt.s32.totalorder %s22, 0
          %s149 = scalar_select %p148, %s22, 0
          %s150 = smul.addr %s149, 4
          %s151 = scalar_lea.vmem %s1, %s150
        $region16: #{_conv_bn_jit.1} parent=11 // pred_fallthru
          _
        // Predicated region
        $region17: #{_conv_bn_jit.1} parent=11 // pred_check
          %p152 = pneg %p102
        $region18: #{_conv_bn_jit.1} parent=11 // pred_check_branch
          %154 = sbr.rel (%p152) target = $region20
        $region19: #{_conv_bn_jit.1} parent=11 // pred_region
          %p155 = scmp.lt.s32.totalorder %s22, 0
          %s156 = scalar_select %p155, %s22, 0
          %s157 = scalar_lea.vmem %s2, %s156
        $region20: #{_conv_bn_jit.1} parent=11 // pred_fallthru
          _
      $region12: #{_conv_bn_jit.1} parent=5 // pred_fallthru
        _
      %p158 = scmp.lt.s32.totalorder %s12, 2
      // Predicated region
      $region21: #{_conv_bn_jit.1} parent=5 // pred_check
        %p159 = pneg %p158
      $region22: #{_conv_bn_jit.1} parent=5 // pred_check_branch
        %161 = sbr.rel (%p159) target = $region24
      $region23: #{_conv_bn_jit.1} parent=5 // pred_region
        // Predicated region
        $region25: #{_conv_bn_jit.1} parent=23 // pred_check
          %p162 = pneg %p44
        $region26: #{_conv_bn_jit.1} parent=23 // pred_check_branch
          %164 = sbr.rel (%p162) target = $region28
        $region27: #{_conv_bn_jit.1} parent=23 // pred_region
          %s165 = smul.u32 32, %s19
          %p166 = scmp.lt.s32.totalorder %s165, 63
          %s167 = scalar_select %p166, %s165, 63
          %s168 = smul.addr %s167, 4
          %s169 = scalar_lea.vmem %s0, %s168
          %s170 = smul.u32 32, %s19
        $region28: #{_conv_bn_jit.1} parent=23 // pred_fallthru
          _
      $region24: #{_conv_bn_jit.1} parent=5 // pred_fallthru
        _
      %p171 = scmp.le.s32.totalorder 1, %s12
      %p172 = scmp.lt.s32.totalorder %s12, 3
      %p173 = pnand %p171, %p172
      %p174 = pneg %p173
      // Predicated region
      $region29: #{_conv_bn_jit.1} parent=5 // pred_check
        _
      $region30: #{_conv_bn_jit.1} parent=5 // pred_check_branch
        %176 = sbr.rel (%p173) target = $region32
      $region31: #{_conv_bn_jit.1} parent=5 // pred_region
        %s177 = ssub.s32 %s12, 1
        %s178 = smul.u32 32, %s21
        %p179 = scmp.lt.s32.totalorder %s178, 63
        %s180 = scalar_select %p179, %s178, 63
        %s181 = smul.addr %s180, 4
        %s182 = scalar_lea.vmem %s0, %s181
        %p183 = pneg %p50
        %p184 = pneg %p47
        %p185 = scmp.lt.s32.totalorder %s22, 0
        %s186 = scalar_select %p185, %s22, 0
        %s187 = smul.addr %s186, 4
        %s188 = scalar_lea.vmem %s1, %s187
        %p189 = pneg %p76
        %p190 = pneg %p73
        %p191 = scmp.lt.s32.totalorder %s22, 0
        %s192 = scalar_select %p191, %s22, 0
        %s193 = scalar_lea.vmem %s2, %s192
        %p194 = pneg %p102
        %p195 = pneg %p99
        %p196 = pneg %p130
        %p197 = pneg %p127
        %s198 = sand.u32 %s117, 1
        %s199 = scalar_lea.sflag [#allocation3], %s198
        %s200 = sand.u32 %s117, 1
        %s201 = smul.addr %s200, 128
        %s202 = scalar_lea.vmem [#allocation2], %s201
        %s203 = smul.u32 32, %s21
        %p204 = scmp.lt.s32.totalorder %s203, 63
        %s205 = scalar_select %p204, %s203, 63
        %s206 = smul.addr %s205, 4
        %s207 = scalar_lea.vmem %s0, %s206
        %s208 = smul.u32 32, %s21
        %p209 = scmp.lt.s32.totalorder %s22, 0
        %s210 = scalar_select %p209, %s22, 0
        %s211 = smul.addr %s210, 4
        %s212 = scalar_lea.vmem %s1, %s211
        %p213 = scmp.lt.s32.totalorder %s22, 0
        %s214 = scalar_select %p213, %s22, 0
        %s215 = scalar_lea.vmem %s2, %s214
        %s216 = smul.u32 32, %s21
        %v218 = vld [vmem:[%s207] sm:$0xf]
        %v219 = vld [vmem:[%s207 + $0x4] sm:$0xf]
        %v220 = vld [vmem:[%s207 + $0x8] sm:$0xf]
        %v221 = vld [vmem:[%s207 + $0xc] sm:$0xf]
        %v222 = vld [vmem:[%s207 + $0x10] sm:$0xf]
        %v223 = vld [vmem:[%s207 + $0x14] sm:$0xf]
        %v224 = vld [vmem:[%s207 + $0x18] sm:$0xf]
        %v225 = vld [vmem:[%s207 + $0x1c] sm:$0xf]
        %v226 = vld [vmem:[%s207 + $0x20] sm:$0xf]
        %v227 = vld [vmem:[%s207 + $0x24] sm:$0xf]
        %v228 = vld [vmem:[%s207 + $0x28] sm:$0xf]
        %v229 = vld [vmem:[%s207 + $0x2c] sm:$0xf]
        %v230 = vld [vmem:[%s207 + $0x30] sm:$0xf]
        %v231 = vld [vmem:[%s207 + $0x34] sm:$0xf]
        %v232 = vld [vmem:[%s207 + $0x38] sm:$0xf]
        %v233 = vld [vmem:[%s207 + $0x3c] sm:$0xf]
        %v234 = vld [vmem:[%s207 + $0x40] sm:$0xf]
        %v235 = vld [vmem:[%s207 + $0x44] sm:$0xf]
        %v236 = vld [vmem:[%s207 + $0x48] sm:$0xf]
        %v237 = vld [vmem:[%s207 + $0x4c] sm:$0xf]
        %v238 = vld [vmem:[%s207 + $0x50] sm:$0xf]
        %v239 = vld [vmem:[%s207 + $0x54] sm:$0xf]
        %v240 = vld [vmem:[%s207 + $0x58] sm:$0xf]
        %v241 = vld [vmem:[%s207 + $0x5c] sm:$0xf]
        %v242 = vld [vmem:[%s207 + $0x60] sm:$0xf]
        %v243 = vld [vmem:[%s207 + $0x64] sm:$0xf]
        %v244 = vld [vmem:[%s207 + $0x68] sm:$0xf]
        %v245 = vld [vmem:[%s207 + $0x6c] sm:$0xf]
        %v246 = vld [vmem:[%s207 + $0x70] sm:$0xf]
        %v247 = vld [vmem:[%s207 + $0x74] sm:$0xf]
        %v248 = vld [vmem:[%s207 + $0x78] sm:$0xf]
        %v249 = vld [vmem:[%s207 + $0x7c] sm:$0xf]
        %v250 = vld [vmem:[%s212] sm:$0xf]
        %v251 = vld [vmem:[%s212 + $0x4] sm:$0xf]
        %v252 = vld [vmem:[%s212 + $0x8] sm:$0xf]
        %v253 = vld [vmem:[%s212 + $0xc] sm:$0x3]
        %v254 = vld [vmem:[%s215] sm:$0x1]
        %v256 = vlaneseq
        %v257 = vshrl.u32 %v256, 7
        %v258 = vsub.s32 0, %v257
        %v259 = vrot.slane %v254, %v258
        %v293 = vunpack.c.l.b16 %v218
        %v294 = vunpack.c.l.b16 %v219
        %v295 = vunpack.c.l.b16 %v220
        %v296 = vunpack.c.l.b16 %v221
        %v297 = vunpack.c.l.b16 %v222
        %v298 = vunpack.c.l.b16 %v223
        %v299 = vunpack.c.l.b16 %v224
        %v300 = vunpack.c.l.b16 %v225
        %v301 = vunpack.c.l.b16 %v226
        %v302 = vunpack.c.l.b16 %v227
        %v303 = vunpack.c.l.b16 %v228
        %v304 = vunpack.c.l.b16 %v229
        %v305 = vunpack.c.l.b16 %v230
        %v306 = vunpack.c.l.b16 %v231
        %v307 = vunpack.c.l.b16 %v232
        %v308 = vunpack.c.l.b16 %v233
        %v309 = vunpack.c.l.b16 %v234
        %v310 = vunpack.c.l.b16 %v235
        %v311 = vunpack.c.l.b16 %v236
        %v312 = vunpack.c.l.b16 %v237
        %v313 = vunpack.c.l.b16 %v238
        %v314 = vunpack.c.l.b16 %v239
        %v315 = vunpack.c.l.b16 %v240
        %v316 = vunpack.c.l.b16 %v241
        %v317 = vunpack.c.l.b16 %v242
        %v318 = vunpack.c.l.b16 %v243
        %v319 = vunpack.c.l.b16 %v244
        %v320 = vunpack.c.l.b16 %v245
        %v321 = vunpack.c.l.b16 %v246
        %v322 = vunpack.c.l.b16 %v247
        %v323 = vunpack.c.l.b16 %v248
        %v324 = vunpack.c.l.b16 %v249
        %v325 = vpack.c.b16 %v294, %v293
        %v326 = vpack.c.b16 %v296, %v295
        %v327 = vpack.c.b16 %v298, %v297
        %v328 = vpack.c.b16 %v300, %v299
        %v329 = vpack.c.b16 %v302, %v301
        %v330 = vpack.c.b16 %v304, %v303
        %v331 = vpack.c.b16 %v306, %v305
        %v332 = vpack.c.b16 %v308, %v307
        %v333 = vpack.c.b16 %v310, %v309
        %v334 = vpack.c.b16 %v312, %v311
        %v335 = vpack.c.b16 %v314, %v313
        %v336 = vpack.c.b16 %v316, %v315
        %v337 = vpack.c.b16 %v318, %v317
        %v338 = vpack.c.b16 %v320, %v319
        %v339 = vpack.c.b16 %v322, %v321
        %v340 = vpack.c.b16 %v324, %v323
        %v345 = vunpack.c.l.b16 %v250
        %v346 = vunpack.c.l.b16 %v251
        %v347 = vunpack.c.l.b16 %v252
        %v348 = vunpack.c.l.b16 %v253
        %v349 = vpack.c.b16 %v346, %v345
        %v350 = vpack.c.b16 %v348, %v347
        %vm352 = vcmask 220160
        %v354 = vsel %vm352, %v325, 0
        %v357 = vsel %vm352, %v326, 0
        %v360 = vsel %vm352, %v327, 0
        %v363 = vsel %vm352, %v328, 0
        %v366 = vsel %vm352, %v329, 0
        %v369 = vsel %vm352, %v330, 0
        %v372 = vsel %vm352, %v331, 0
        %v375 = vsel %vm352, %v332, 0
        %v378 = vsel %vm352, %v333, 0
        %v381 = vsel %vm352, %v334, 0
        %v384 = vsel %vm352, %v335, 0
        %v387 = vsel %vm352, %v336, 0
        %v390 = vsel %vm352, %v337, 0
        %v393 = vsel %vm352, %v338, 0
        %v396 = vsel %vm352, %v339, 0
        %v399 = vsel %vm352, %v340, 0
        %vm401 = vcmask 1044480
        %vm402 = vcmask 1045504
        %v403 = vsel %vm401, 4294967295, 65535
        %v404 = vsel %vm402, %v403, 0
        %v406 = vand.u32 %v350, %v404
        %408 = vmatprep.subr.bf16.mxu0 0
        %409 = vmatpush1.bf16.msra.mxu0 %v349
        %410 = vmatprep.subr.bf16.mxu0 0
        %411 = vmatpush1.bf16.msra.mxu0 %v406
        %412 = vmatprep.subr.bf16.mxu0 0
        %413 = vmatpush1.bf16.msra.mxu0 0
        %414 = vmatprep.subr.bf16.mxu0 0
        %415 = vmatpush1.bf16.msra.mxu0 0
        %416 = vmatprep.subr.bf16.mxu0 0
        %417 = vmatpush1.bf16.msra.mxu0 0
        %418 = vmatprep.subr.bf16.mxu0 0
        %419 = vmatpush1.bf16.msra.mxu0 0
        %420 = vmatprep.subr.bf16.mxu0 0
        %421 = vmatpush1.bf16.msra.mxu0 0
        %422 = vmatprep.subr.bf16.mxu0 0
        %423 = vmatpush1.bf16.msra.mxu0 0
        %424 = vmatprep.subr.bf16.mxu0 0
        %425 = vmatpush1.bf16.msra.mxu0 0
        %426 = vmatprep.subr.bf16.mxu0 0
        %427 = vmatpush1.bf16.msra.mxu0 0
        %428 = vmatprep.subr.bf16.mxu0 0
        %429 = vmatpush1.bf16.msra.mxu0 0
        %430 = vmatprep.subr.bf16.mxu0 0
        %431 = vmatpush1.bf16.msra.mxu0 0
        %432 = vmatprep.subr.bf16.mxu0 0
        %433 = vmatpush1.bf16.msra.mxu0 0
        %434 = vmatprep.subr.bf16.mxu0 0
        %435 = vmatpush1.bf16.msra.mxu0 0
        %436 = vmatprep.subr.bf16.mxu0 0
        %437 = vmatpush1.bf16.msra.mxu0 0
        %438 = vmatprep.subr.bf16.mxu0 0
        %439 = vmatpush1.bf16.msra.mxu0 0
        %440 = vmatprep.mubr.bf16.mxu0 0
        %441 = vmatmul.mubr.bf16.gmra.mrb[0].mxu0 %v354
        %v442 = vpop.f32.mrb[0].mxu0
        %v443 = vadd.f32 %v259, %v442
        %v444 = vpop.f32.mrb[0].mxu0
        %v445 = vpop.f32.mrb[0].mxu0
        %v446 = vadd.f32 %v259, %v445
        %v447 = vpop.f32.mrb[0].mxu0
        %448 = vmatprep.mubr.bf16.mxu0 0
        %449 = vmatmul.mubr.bf16.gmra.mrb[0].mxu0 %v357
        %v450 = vpop.f32.mrb[0].mxu0
        %v451 = vadd.f32 %v259, %v450
        %v452 = vpop.f32.mrb[0].mxu0
        %v453 = vpop.f32.mrb[0].mxu0
        %v454 = vadd.f32 %v259, %v453
        %v455 = vpop.f32.mrb[0].mxu0
        %456 = vmatprep.mubr.bf16.mxu0 0
        %457 = vmatmul.mubr.bf16.gmra.mrb[0].mxu0 %v360
        %v458 = vpop.f32.mrb[0].mxu0
        %v459 = vadd.f32 %v259, %v458
        %v460 = vpop.f32.mrb[0].mxu0
        %v461 = vpop.f32.mrb[0].mxu0
        %v462 = vadd.f32 %v259, %v461
        %v463 = vpop.f32.mrb[0].mxu0
        %464 = vmatprep.mubr.bf16.mxu0 0
        %465 = vmatmul.mubr.bf16.gmra.mrb[0].mxu0 %v363
        %v466 = vpop.f32.mrb[0].mxu0
        %v467 = vadd.f32 %v259, %v466
        %v468 = vpop.f32.mrb[0].mxu0
        %v469 = vpop.f32.mrb[0].mxu0
        %v470 = vadd.f32 %v259, %v469
        %v471 = vpop.f32.mrb[0].mxu0
        %472 = vmatprep.mubr.bf16.mxu0 0
        %473 = vmatmul.mubr.bf16.gmra.mrb[0].mxu0 %v366
        %v474 = vpop.f32.mrb[0].mxu0
        %v475 = vadd.f32 %v259, %v474
        %v476 = vpop.f32.mrb[0].mxu0
        %v477 = vpop.f32.mrb[0].mxu0
        %v478 = vadd.f32 %v259, %v477
        %v479 = vpop.f32.mrb[0].mxu0
        %480 = vmatprep.mubr.bf16.mxu0 0
        %481 = vmatmul.mubr.bf16.gmra.mrb[0].mxu0 %v369
        %v482 = vpop.f32.mrb[0].mxu0
        %v483 = vadd.f32 %v259, %v482
        %v484 = vpop.f32.mrb[0].mxu0
        %v485 = vpop.f32.mrb[0].mxu0
        %v486 = vadd.f32 %v259, %v485
        %v487 = vpop.f32.mrb[0].mxu0
        %488 = vmatprep.mubr.bf16.mxu0 0
        %489 = vmatmul.mubr.bf16.gmra.mrb[0].mxu0 %v372
        %v490 = vpop.f32.mrb[0].mxu0
        %v491 = vadd.f32 %v259, %v490
        %v492 = vpop.f32.mrb[0].mxu0
        %v493 = vpop.f32.mrb[0].mxu0
        %v494 = vadd.f32 %v259, %v493
        %v495 = vpop.f32.mrb[0].mxu0
        %496 = vmatprep.mubr.bf16.mxu0 0
        %497 = vmatmul.mubr.bf16.gmra.mrb[0].mxu0 %v375
        %v498 = vpop.f32.mrb[0].mxu0
        %v499 = vadd.f32 %v259, %v498
        %v500 = vpop.f32.mrb[0].mxu0
        %v501 = vpop.f32.mrb[0].mxu0
        %v502 = vadd.f32 %v259, %v501
        %v503 = vpop.f32.mrb[0].mxu0
        %504 = vmatprep.mubr.bf16.mxu0 0
        %505 = vmatmul.mubr.bf16.gmra.mrb[0].mxu0 %v378
        %v506 = vpop.f32.mrb[0].mxu0
        %v507 = vadd.f32 %v259, %v506
        %v508 = vpop.f32.mrb[0].mxu0
        %v509 = vpop.f32.mrb[0].mxu0
        %v510 = vadd.f32 %v259, %v509
        %v511 = vpop.f32.mrb[0].mxu0
        %512 = vmatprep.mubr.bf16.mxu0 0
        %513 = vmatmul.mubr.bf16.gmra.mrb[0].mxu0 %v381
        %v514 = vpop.f32.mrb[0].mxu0
        %v515 = vadd.f32 %v259, %v514
        %v516 = vpop.f32.mrb[0].mxu0
        %v517 = vpop.f32.mrb[0].mxu0
        %v518 = vadd.f32 %v259, %v517
        %v519 = vpop.f32.mrb[0].mxu0
        %520 = vmatprep.mubr.bf16.mxu0 0
        %521 = vmatmul.mubr.bf16.gmra.mrb[0].mxu0 %v384
        %v522 = vpop.f32.mrb[0].mxu0
        %v523 = vadd.f32 %v259, %v522
        %v524 = vpop.f32.mrb[0].mxu0
        %v525 = vpop.f32.mrb[0].mxu0
        %v526 = vadd.f32 %v259, %v525
        %v527 = vpop.f32.mrb[0].mxu0
        %528 = vmatprep.mubr.bf16.mxu0 0
        %529 = vmatmul.mubr.bf16.gmra.mrb[0].mxu0 %v387
        %v530 = vpop.f32.mrb[0].mxu0
        %v531 = vadd.f32 %v259, %v530
        %v532 = vpop.f32.mrb[0].mxu0
        %v533 = vpop.f32.mrb[0].mxu0
        %v534 = vadd.f32 %v259, %v533
        %v535 = vpop.f32.mrb[0].mxu0
        %536 = vmatprep.mubr.bf16.mxu0 0
        %537 = vmatmul.mubr.bf16.gmra.mrb[0].mxu0 %v390
        %v538 = vpop.f32.mrb[0].mxu0
        %v539 = vadd.f32 %v259, %v538
        %v540 = vpop.f32.mrb[0].mxu0
        %v541 = vpop.f32.mrb[0].mxu0
        %v542 = vadd.f32 %v259, %v541
        %v543 = vpop.f32.mrb[0].mxu0
        %544 = vmatprep.mubr.bf16.mxu0 0
        %545 = vmatmul.mubr.bf16.gmra.mrb[0].mxu0 %v393
        %v546 = vpop.f32.mrb[0].mxu0
        %v547 = vadd.f32 %v259, %v546
        %v548 = vpop.f32.mrb[0].mxu0
        %v549 = vpop.f32.mrb[0].mxu0
        %v550 = vadd.f32 %v259, %v549
        %v551 = vpop.f32.mrb[0].mxu0
        %552 = vmatprep.mubr.bf16.mxu0 0
        %553 = vmatmul.mubr.bf16.gmra.mrb[0].mxu0 %v396
        %v554 = vpop.f32.mrb[0].mxu0
        %v555 = vadd.f32 %v259, %v554
        %v556 = vpop.f32.mrb[0].mxu0
        %v557 = vpop.f32.mrb[0].mxu0
        %v558 = vadd.f32 %v259, %v557
        %v559 = vpop.f32.mrb[0].mxu0
        %560 = vmatprep.mubr.bf16.mxu0 0
        %561 = vmatmul.mubr.bf16.gmra.mrb[0].mxu0 %v399
        %v562 = vpop.f32.mrb[0].mxu0
        %v563 = vadd.f32 %v259, %v562
        %v564 = vpop.f32.mrb[0].mxu0
        %v565 = vpop.f32.mrb[0].mxu0
        %v566 = vadd.f32 %v259, %v565
        %v567 = vpop.f32.mrb[0].mxu0
        %568 = vdwg.mxu0
        %v569 = vmax.f32 %v443, 0.0
        %v570 = vmax.f32 %v446, 0.0
        %v571 = vmax.f32 %v451, 0.0
        %v572 = vmax.f32 %v454, 0.0
        %v573 = vmax.f32 %v459, 0.0
        %v574 = vmax.f32 %v462, 0.0
        %v575 = vmax.f32 %v467, 0.0
        %v576 = vmax.f32 %v470, 0.0
        %v577 = vmax.f32 %v475, 0.0
        %v578 = vmax.f32 %v478, 0.0
        %v579 = vmax.f32 %v483, 0.0
        %v580 = vmax.f32 %v486, 0.0
        %v581 = vmax.f32 %v491, 0.0
        %v582 = vmax.f32 %v494, 0.0
        %v583 = vmax.f32 %v499, 0.0
        %v584 = vmax.f32 %v502, 0.0
        %v585 = vmax.f32 %v507, 0.0
        %v586 = vmax.f32 %v510, 0.0
        %v587 = vmax.f32 %v515, 0.0
        %v588 = vmax.f32 %v518, 0.0
        %v589 = vmax.f32 %v523, 0.0
        %v590 = vmax.f32 %v526, 0.0
        %v591 = vmax.f32 %v531, 0.0
        %v592 = vmax.f32 %v534, 0.0
        %v593 = vmax.f32 %v539, 0.0
        %v594 = vmax.f32 %v542, 0.0
        %v595 = vmax.f32 %v547, 0.0
        %v596 = vmax.f32 %v550, 0.0
        %v597 = vmax.f32 %v555, 0.0
        %v598 = vmax.f32 %v558, 0.0
        %v599 = vmax.f32 %v563, 0.0
        %v600 = vmax.f32 %v566, 0.0
        %v601 = vpack.c.bf16 %v570, %v569
        %v602 = vpack.c.bf16 %v572, %v571
        %v603 = vpack.c.bf16 %v574, %v573
        %v604 = vpack.c.bf16 %v576, %v575
        %v605 = vpack.c.bf16 %v578, %v577
        %v606 = vpack.c.bf16 %v580, %v579
        %v607 = vpack.c.bf16 %v582, %v581
        %v608 = vpack.c.bf16 %v584, %v583
        %v609 = vpack.c.bf16 %v586, %v585
        %v610 = vpack.c.bf16 %v588, %v587
        %v611 = vpack.c.bf16 %v590, %v589
        %v612 = vpack.c.bf16 %v592, %v591
        %v613 = vpack.c.bf16 %v594, %v593
        %v614 = vpack.c.bf16 %v596, %v595
        %v615 = vpack.c.bf16 %v598, %v597
        %v616 = vpack.c.bf16 %v600, %v599
        %v633 = vunpack.c.l.b16 %v601
        %v634 = vunpack.c.h.b16 %v601
        %v635 = vunpack.c.l.b16 %v602
        %v636 = vunpack.c.h.b16 %v602
        %v637 = vunpack.c.l.b16 %v603
        %v638 = vunpack.c.h.b16 %v603
        %v639 = vunpack.c.l.b16 %v604
        %v640 = vunpack.c.h.b16 %v604
        %v641 = vunpack.c.l.b16 %v605
        %v642 = vunpack.c.h.b16 %v605
        %v643 = vunpack.c.l.b16 %v606
        %v644 = vunpack.c.h.b16 %v606
        %v645 = vunpack.c.l.b16 %v607
        %v646 = vunpack.c.h.b16 %v607
        %v647 = vunpack.c.l.b16 %v608
        %v648 = vunpack.c.h.b16 %v608
        %v649 = vunpack.c.l.b16 %v609
        %v650 = vunpack.c.h.b16 %v609
        %v651 = vunpack.c.l.b16 %v610
        %v652 = vunpack.c.h.b16 %v610
        %v653 = vunpack.c.l.b16 %v611
        %v654 = vunpack.c.h.b16 %v611
        %v655 = vunpack.c.l.b16 %v612
        %v656 = vunpack.c.h.b16 %v612
        %v657 = vunpack.c.l.b16 %v613
        %v658 = vunpack.c.h.b16 %v613
        %v659 = vunpack.c.l.b16 %v614
        %v660 = vunpack.c.h.b16 %v614
        %v661 = vunpack.c.l.b16 %v615
        %v662 = vunpack.c.h.b16 %v615
        %v663 = vunpack.c.l.b16 %v616
        %v664 = vunpack.c.h.b16 %v616
        %v665 = vpack.c.b16 %v633, %v633
        %v666 = vpack.c.b16 %v634, %v634
        %v667 = vpack.c.b16 %v635, %v635
        %v668 = vpack.c.b16 %v636, %v636
        %v669 = vpack.c.b16 %v637, %v637
        %v670 = vpack.c.b16 %v638, %v638
        %v671 = vpack.c.b16 %v639, %v639
        %v672 = vpack.c.b16 %v640, %v640
        %v673 = vpack.c.b16 %v641, %v641
        %v674 = vpack.c.b16 %v642, %v642
        %v675 = vpack.c.b16 %v643, %v643
        %v676 = vpack.c.b16 %v644, %v644
        %v677 = vpack.c.b16 %v645, %v645
        %v678 = vpack.c.b16 %v646, %v646
        %v679 = vpack.c.b16 %v647, %v647
        %v680 = vpack.c.b16 %v648, %v648
        %v681 = vpack.c.b16 %v649, %v649
        %v682 = vpack.c.b16 %v650, %v650
        %v683 = vpack.c.b16 %v651, %v651
        %v684 = vpack.c.b16 %v652, %v652
        %v685 = vpack.c.b16 %v653, %v653
        %v686 = vpack.c.b16 %v654, %v654
        %v687 = vpack.c.b16 %v655, %v655
        %v688 = vpack.c.b16 %v656, %v656
        %v689 = vpack.c.b16 %v657, %v657
        %v690 = vpack.c.b16 %v658, %v658
        %v691 = vpack.c.b16 %v659, %v659
        %v692 = vpack.c.b16 %v660, %v660
        %v693 = vpack.c.b16 %v661, %v661
        %v694 = vpack.c.b16 %v662, %v662
        %v695 = vpack.c.b16 %v663, %v663
        %v696 = vpack.c.b16 %v664, %v664
        %729 = vst [vmem:[%s202] sm:$0xf] %v665
        %730 = vst [vmem:[%s202 + $0x4] sm:$0xf] %v666
        %731 = vst [vmem:[%s202 + $0x8] sm:$0xf] %v667
        %732 = vst [vmem:[%s202 + $0xc] sm:$0xf] %v668
        %733 = vst [vmem:[%s202 + $0x10] sm:$0xf] %v669
        %734 = vst [vmem:[%s202 + $0x14] sm:$0xf] %v670
        %735 = vst [vmem:[%s202 + $0x18] sm:$0xf] %v671
        %736 = vst [vmem:[%s202 + $0x1c] sm:$0xf] %v672
        %737 = vst [vmem:[%s202 + $0x20] sm:$0xf] %v673
        %738 = vst [vmem:[%s202 + $0x24] sm:$0xf] %v674
        %739 = vst [vmem:[%s202 + $0x28] sm:$0xf] %v675
        %740 = vst [vmem:[%s202 + $0x2c] sm:$0xf] %v676
        %741 = vst [vmem:[%s202 + $0x30] sm:$0xf] %v677
        %742 = vst [vmem:[%s202 + $0x34] sm:$0xf] %v678
        %743 = vst [vmem:[%s202 + $0x38] sm:$0xf] %v679
        %744 = vst [vmem:[%s202 + $0x3c] sm:$0xf] %v680
        %745 = vst [vmem:[%s202 + $0x40] sm:$0xf] %v681
        %746 = vst [vmem:[%s202 + $0x44] sm:$0xf] %v682
        %747 = vst [vmem:[%s202 + $0x48] sm:$0xf] %v683
        %748 = vst [vmem:[%s202 + $0x4c] sm:$0xf] %v684
        %749 = vst [vmem:[%s202 + $0x50] sm:$0xf] %v685
        %750 = vst [vmem:[%s202 + $0x54] sm:$0xf] %v686
        %751 = vst [vmem:[%s202 + $0x58] sm:$0xf] %v687
        %752 = vst [vmem:[%s202 + $0x5c] sm:$0xf] %v688
        %753 = vst [vmem:[%s202 + $0x60] sm:$0xf] %v689
        %754 = vst [vmem:[%s202 + $0x64] sm:$0xf] %v690
        %755 = vst [vmem:[%s202 + $0x68] sm:$0xf] %v691
        %756 = vst [vmem:[%s202 + $0x6c] sm:$0xf] %v692
        %757 = vst [vmem:[%s202 + $0x70] sm:$0xf] %v693
        %758 = vst [vmem:[%s202 + $0x74] sm:$0xf] %v694
        %759 = vst [vmem:[%s202 + $0x78] sm:$0xf] %v695
        %760 = vst [vmem:[%s202 + $0x7c] sm:$0xf] %v696
        %s761 = sand.u32 %s117, 1
        %s762 = scalar_lea.sflag [#allocation3], %s761
        %s763 = sand.u32 %s117, 1
        %s764 = smul.addr %s763, 128
        %s765 = scalar_lea.vmem [#allocation2], %s764
        // Predicated region
        $region33: #{_conv_bn_jit.1} parent=31 // pred_check
          %p766 = pneg %p127
        $region34: #{_conv_bn_jit.1} parent=31 // pred_check_branch
          %768 = sbr.rel (%p766) target = $region36
        $region35: #{_conv_bn_jit.1} parent=31 // pred_region
          %s769 = smul.u32 32, %s21
          %s771 = ssub.s32 2048, 2048
          %772 = vsyncadd %s762, %s771
          %s773 = sadd.s32 %s22, %s769
          %s774 = smul.addr %s773, 64
          %s775 = scalar_lea.hbm %s3, %s774
          %s776 = sshll.u32 %s765, 4
          %s777 = int_to_ptr.vmem [resolvable:$true] %s776
          %782 = dma.vmem_to_hbm [thread:$0]  %s777, 2048, %s775, %s762, 64, 64, 4
        $region36: #{_conv_bn_jit.1} parent=31 // pred_fallthru
          _
      $region32: #{_conv_bn_jit.1} parent=5 // pred_fallthru
        _
      %p783 = scmp.le.s32.totalorder 2, %s12
      // Predicated region
      $region37: #{_conv_bn_jit.1} parent=5 // pred_check
        %p784 = pneg %p783
      $region38: #{_conv_bn_jit.1} parent=5 // pred_check_branch
        %786 = sbr.rel (%p784) target = $region40
      $region39: #{_conv_bn_jit.1} parent=5 // pred_region
        %s787 = ssub.s32 %s12, 2
        // Predicated region
        $region41: #{_conv_bn_jit.1} parent=39 // pred_check
          %p788 = pneg %p133
        $region42: #{_conv_bn_jit.1} parent=39 // pred_check_branch
          %790 = sbr.rel (%p788) target = $region44
        $region43: #{_conv_bn_jit.1} parent=39 // pred_region
          %s791 = sand.u32 %s118, 1
          %s792 = scalar_lea.sflag [#allocation3], %s791
          %s793 = sand.u32 %s118, 1
          %s794 = smul.addr %s793, 128
          %s795 = scalar_lea.vmem [#allocation2], %s794
          %796 = dma.done %s792, 2048
        $region44: #{_conv_bn_jit.1} parent=39 // pred_fallthru
          _
      $region40: #{_conv_bn_jit.1} parent=5 // pred_fallthru
        _
    $region6: #{_conv_bn_jit.1} parent=1 // loop_footer
      %s16 = sadd.s32 1, %s12
    $region7: #{_conv_bn_jit.1} parent=1 // loop_footer_branch
      %11 = sbr.rel target = $region3
    $region8: #{_conv_bn_jit.1} parent=1 // loop_exit
      _
    %797 = vsyncpa [#allocation3], 1
    %s798 = scalar_lea.sflag [#allocation3], 1
    %799 = vsyncpa %s798, 1

</llo_original>
